<compile_context>
chip_gen: v6e
topology: v6e:2x2x1
jax: 0.10.0
libtpu: 0.0.40
codegen_flags: <defaults>
</compile_context>

<pallas_src>
import math
import functools

import jax
import jax.numpy as jnp
from jax.experimental import pallas as pl
from jax.experimental.pallas import tpu as pltpu


# ------------------------------ tiling helpers ------------------------------ #

def _tile(dim, target):
    """Largest tile <= target that divides dim (multiples of 128), else the full dim."""
    if dim <= target:
        return dim
    t = target
    while t >= 128:
        if dim % t == 0:
            return t
        t //= 2
    return dim


_VMEM_LIMIT = 48 * 1024 * 1024  # fits v7x's 64 MiB physical VMEM with headroom


# ------------------------------ matmul kernel ------------------------------- #

def _matmul_kernel(x_ref, w_ref, *args, act, has_bias, has_residual, transpose_rhs):
    """acc += x @ w (or x @ w^T); on the last K step: +bias, GELU, +residual, store."""
    pos = 0
    b_ref = None
    r_ref = None
    if has_bias:
        b_ref = args[pos]
        pos += 1
    if has_residual:
        r_ref = args[pos]
        pos += 1
    o_ref = args[pos]
    acc_ref = args[pos + 1]

    k = pl.program_id(2)

    @pl.when(k == 0)
    def _():
        acc_ref[...] = jnp.zeros_like(acc_ref)

    x = x_ref[...]
    w = w_ref[...]
    if transpose_rhs:
        # contract last dim of x with last dim of w (w stored as (N, K)) -> no w.T copy
        acc_ref[...] += jax.lax.dot_general(
            x, w, (((1,), (1,)), ((), ())), preferred_element_type=jnp.float32)
    else:
        acc_ref[...] += jnp.dot(x, w, preferred_element_type=jnp.float32)

    @pl.when(k == pl.num_programs(2) - 1)
    def _():
        y = acc_ref[...]
        if has_bias:
            y = y + b_ref[...].astype(jnp.float32)
        if act == "gelu":
            # exact (erf-based) GELU, matching torch.nn.functional.gelu default
            y = 0.5 * y * (1.0 + jax.lax.erf(y * (1.0 / math.sqrt(2.0))))
        if has_residual:
            y = y + r_ref[...].astype(jnp.float32)
        o_ref[...] = y.astype(o_ref.dtype)


def pallas_linear(x, w, b=None, residual=None, act=None, transpose_rhs=False,
                  out_dtype=jnp.float32, tm=256, tn=512, tk=512):
    """y = act(x @ w [+ b]) [+ residual].  w is (K, N), or (N, K) if transpose_rhs."""
    M, K = x.shape
    N = w.shape[0] if transpose_rhs else w.shape[1]
    tm = _tile(M, tm)
    tn = _tile(N, tn)
    tk = _tile(K, tk)
    grid = (M // tm, N // tn, K // tk)

    in_specs = [
        pl.BlockSpec((tm, tk), lambda i, j, k: (i, k)),
        (pl.BlockSpec((tn, tk), lambda i, j, k: (j, k)) if transpose_rhs
         else pl.BlockSpec((tk, tn), lambda i, j, k: (k, j))),
    ]
    inputs = [x, w]
    if b is not None:
        in_specs.append(pl.BlockSpec((1, tn), lambda i, j, k: (0, j)))
        inputs.append(b.reshape(1, N).astype(jnp.float32))
    if residual is not None:
        in_specs.append(pl.BlockSpec((tm, tn), lambda i, j, k: (i, j)))
        inputs.append(residual)

    kernel = functools.partial(
        _matmul_kernel, act=act, has_bias=b is not None,
        has_residual=residual is not None, transpose_rhs=transpose_rhs)

    cost = pl.CostEstimate(
        flops=2 * M * N * K,
        transcendentals=(M * N if act == "gelu" else 0),
        bytes_accessed=(x.size * x.dtype.itemsize + w.size * w.dtype.itemsize
                        + M * N * jnp.dtype(out_dtype).itemsize),
    )

    return pl.pallas_call(
        kernel,
        out_shape=jax.ShapeDtypeStruct((M, N), out_dtype),
        grid=grid,
        in_specs=in_specs,
        out_specs=pl.BlockSpec((tm, tn), lambda i, j, k: (i, j)),
        scratch_shapes=[pltpu.VMEM((tm, tn), jnp.float32)],
        compiler_params=pltpu.CompilerParams(
            dimension_semantics=("parallel", "parallel", "arbitrary"),
            vmem_limit_bytes=_VMEM_LIMIT),
        cost_estimate=cost,
    )(*inputs)


# ------------------------------ layernorm kernel ----------------------------- #

def _layernorm_kernel(x_ref, g_ref, b_ref, o_ref, *, eps):
    x = x_ref[...].astype(jnp.float32)
    mean = jnp.mean(x, axis=-1, keepdims=True)
    xc = x - mean
    var = jnp.mean(xc * xc, axis=-1, keepdims=True)
    y = xc * jax.lax.rsqrt(var + eps)
    o_ref[...] = (y * g_ref[...] + b_ref[...]).astype(o_ref.dtype)


def pallas_layernorm(x, gamma, beta, eps=1e-5, out_dtype=jnp.float32, tm=256):
    M, D = x.shape
    tm = _tile(M, tm)
    return pl.pallas_call(
        functools.partial(_layernorm_kernel, eps=eps),
        out_shape=jax.ShapeDtypeStruct((M, D), out_dtype),
        grid=(M // tm,),
        in_specs=[
            pl.BlockSpec((tm, D), lambda i: (i, 0)),
            pl.BlockSpec((1, D), lambda i: (0, 0)),
            pl.BlockSpec((1, D), lambda i: (0, 0)),
        ],
        out_specs=pl.BlockSpec((tm, D), lambda i: (i, 0)),
        compiler_params=pltpu.CompilerParams(
            dimension_semantics=("parallel",)),
    )(x, gamma.reshape(1, D).astype(jnp.float32), beta.reshape(1, D).astype(jnp.float32))


# ------------------------------ attention kernel ----------------------------- #

def _attention_kernel(mask_ref, qkv_ref, o_ref, *, num_heads, scale):
    """Per-batch causal self-attention on (S, 3D) bf16 input, (S, D) output (all heads)."""
    S, D3 = qkv_ref.shape
    D = D3 // 3
    Dh = D // num_heads

    # combined causal + padding additive bias, built ONCE per batch (shared by all heads)
    row = jax.lax.broadcasted_iota(jnp.int32, (S, S), 0)
    col = jax.lax.broadcasted_iota(jnp.int32, (S, S), 1)
    pad = mask_ref[...]                                             # (1, S) additive f32
    bias = jnp.where(col <= row, pad, jnp.float32(-1e9))            # (S, S)

    for h in range(num_heads):
        q = qkv_ref[:, pl.ds(h * Dh, Dh)]
        k = qkv_ref[:, pl.ds(D + h * Dh, Dh)]
        v = qkv_ref[:, pl.ds(2 * D + h * Dh, Dh)]
        # fold 1/sqrt(Dh) into q (O(S*Dh) instead of scaling the (S,S) scores)
        qs = (q.astype(jnp.float32) * scale).astype(k.dtype)
        # contract last dims of q and k directly -- no in-kernel k.T / XLU transpose
        s = jax.lax.dot_general(qs, k, (((1,), (1,)), ((), ())),
                                preferred_element_type=jnp.float32)  # (S, S)
        s = s + bias
        m = jnp.max(s, axis=-1, keepdims=True)
        p = jnp.exp(s - m)
        l = jnp.sum(p, axis=-1, keepdims=True)
        out = jnp.dot(p.astype(v.dtype), v, preferred_element_type=jnp.float32)
        out = out * pl.reciprocal(l, approx=True)
        o_ref[:, pl.ds(h * Dh, Dh)] = out.astype(o_ref.dtype)


def pallas_attention(qkv, ext_mask, num_heads):
    """qkv: (B, S, 3D) bf16; ext_mask: (B, 1, S) additive f32; returns (B, S, D) bf16."""
    B, S, D3 = qkv.shape
    D = D3 // 3
    Dh = D // num_heads
    scale = 1.0 / math.sqrt(Dh)
    # TODO(synk): for long sequences convert to a flash-style kernel (grid over S//tq with a
    # KV reduction axis and online-softmax scratch) to avoid the full (S, S) score matrix.
    return pl.pallas_call(
        functools.partial(_attention_kernel, num_heads=num_heads, scale=scale),
        out_shape=jax.ShapeDtypeStruct((B, S, D), jnp.bfloat16),
        grid=(B,),
        in_specs=[
            pl.BlockSpec((None, 1, S), lambda b: (b, 0, 0)),
            pl.BlockSpec((None, S, D3), lambda b: (b, 0, 0)),
        ],
        out_specs=pl.BlockSpec((None, S, D), lambda b: (b, 0, 0)),
        compiler_params=pltpu.CompilerParams(
            dimension_semantics=("parallel",),
            vmem_limit_bytes=_VMEM_LIMIT),
    )(ext_mask, qkv)


# ------------------------------ model definition ----------------------------- #

def init_params(key, *, vocab, d, n_layers, n_heads, d_ff, max_pos):
    del n_heads  # head count is a forward-time argument

    def normal(k, shape, std=0.02, dtype=jnp.bfloat16):
        return (std * jax.random.normal(k, shape, jnp.float32)).astype(dtype)

    keys = jax.random.split(key, 2 + 6 * n_layers)
    ki = iter(keys)
    params = {
        "wte": normal(next(ki), (vocab, d)),          # bf16: used for embed + LM head
        "wpe": normal(next(ki), (max_pos, d)),
        "ln_f_g": jnp.ones((d,), jnp.float32),
        "ln_f_b": jnp.zeros((d,), jnp.float32),
        "layers": [],
    }
    for _ in range(n_layers):
        wq = normal(next(ki), (d, d))
        wk = normal(next(ki), (d, d))
        wv = normal(next(ki), (d, d))
        lp = {
            "ln1_g": jnp.ones((d,), jnp.float32), "ln1_b": jnp.zeros((d,), jnp.float32),
            "w_qkv": jnp.concatenate([wq, wk, wv], axis=1),          # (d, 3d) bf16, fused QKV
            "b_qkv": jnp.zeros((3 * d,), jnp.float32),
            "wo": normal(next(ki), (d, d)), "bo": jnp.zeros((d,), jnp.float32),
            "ln2_g": jnp.ones((d,), jnp.float32), "ln2_b": jnp.zeros((d,), jnp.float32),
            "w_in": normal(next(ki), (d, d_ff)), "b_in": jnp.zeros((d_ff,), jnp.float32),
            "w_out": normal(next(ki), (d_ff, d)), "b_out": jnp.zeros((d,), jnp.float32),
        }
        params["layers"].append(lp)
    return params


def sonnet_gpt_forward(params, input_ids, attention_mask, num_heads,
                       output_hidden_states=False):
    """Mirrors SonnetGPT.forward: per-token logits over the vocab (weight-tied head)."""
    B, S = input_ids.shape
    D = params["wte"].shape[1]

    # embeddings (gather kept in JAX glue; dropout = identity at inference)
    tok = jnp.take(params["wte"], input_ids, axis=0)                 # (B, S, D) bf16
    pos = params["wpe"][:S][None]                                    # (1, S, D) bf16
    h = (tok + pos).reshape(B * S, D).astype(jnp.float32)            # f32 residual stream

    # extended attention mask: 0 for keep, -10000 for padded positions
    ext_mask = ((1.0 - attention_mask.astype(jnp.float32)) * -10000.0).reshape(B, 1, S)

    for lp in params["layers"]:
        # pre-LN self-attention block (fused QKV projection, no head transposes)
        ln1 = pallas_layernorm(h, lp["ln1_g"], lp["ln1_b"], out_dtype=jnp.bfloat16)
        qkv = pallas_linear(ln1, lp["w_qkv"], lp["b_qkv"], out_dtype=jnp.bfloat16)
        attn = pallas_attention(qkv.reshape(B, S, 3 * D), ext_mask, num_heads)
        h = pallas_linear(attn.reshape(B * S, D), lp["wo"], lp["bo"], residual=h)

        # pre-LN MLP block (GELU + residual fused into the matmul epilogues)
        ln2 = pallas_layernorm(h, lp["ln2_g"], lp["ln2_b"], out_dtype=jnp.bfloat16)
        mid = pallas_linear(ln2, lp["w_in"], lp["b_in"], act="gelu", out_dtype=jnp.bfloat16)
        h = pallas_linear(mid, lp["w_out"], lp["b_out"], residual=h)

    h_fin = pallas_layernorm(h, params["ln_f_g"], params["ln_f_b"])   # final LN, f32
    # hidden_state_to_token: contract against wte stored as (vocab, D) -- no wte.T copy
    logits = pallas_linear(h_fin.astype(jnp.bfloat16), params["wte"], transpose_rhs=True)
    logits = logits.reshape(B, S, -1)
    if output_hidden_states:
        return logits, h_fin.reshape(B, S, D)
    return logits


# TODO(synk): SonnetGPT.generate (tokenizer decode, top-p multinomial sampling loop) is
# host-side control flow with no clean Pallas equivalent; only forward() is implemented.


if __name__ == "__main__":
    # small config consistent with the module (args.d, args.l, args.num_heads)
    B, S = 2, 8
    D, H, L = 32, 2, 2
    VOCAB, D_FF, MAX_POS = 128, 4 * 32, 64

    key = jax.random.PRNGKey(0)
    pkey, ikey = jax.random.split(key)
    params = init_params(pkey, vocab=VOCAB, d=D, n_layers=L, n_heads=H,
                         d_ff=D_FF, max_pos=MAX_POS)

    input_ids = jax.random.randint(ikey, (B, S), 0, VOCAB, dtype=jnp.int32)
    attention_mask = jnp.ones((B, S), dtype=jnp.int32)
    attention_mask = attention_mask.at[1, -2:].set(0)                 # exercise padding mask

    logits = sonnet_gpt_forward(params, input_ids, attention_mask, num_heads=H)
    logits = jax.block_until_ready(logits)

    assert logits.shape == (B, S, VOCAB), logits.shape
    assert bool(jnp.all(jnp.isfinite(logits)))
    print("KERNEL_OK")
</pallas_src>

<mosaic_0001>
module attributes {stable_mosaic.version = 11 : i64} {
  func.func @_layernorm_kernel(%arg0: i32, %arg1: memref<16x32xf32, #tpu.memory_space<vmem>>, %arg2: memref<1x32xf32, #tpu.memory_space<vmem>>, %arg3: memref<1x32xf32, #tpu.memory_space<vmem>>, %arg4: memref<16x32xbf16, #tpu.memory_space<vmem>>) attributes {dimension_semantics = [#tpu.dimension_semantics<parallel>], iteration_bounds = array<i64: 1>, scalar_prefetch = 0 : i64, scratch_operands = 0 : i64, tpu.core_type = #tpu.core_type<tc>, window_params = [{transform_indices = @transform_0, window_bounds = array<i64: 16, 32>}, {pipeline_mode = #tpu.pipeline_mode<synchronous>, transform_indices = @transform_1, window_bounds = array<i64: 1, 32>}, {pipeline_mode = #tpu.pipeline_mode<synchronous>, transform_indices = @transform_2, window_bounds = array<i64: 1, 32>}, {transform_indices = @transform_3, window_bounds = array<i64: 16, 32>}]} {
    %c0 = arith.constant 0 : index
    %c0_0 = arith.constant 0 : index
    %0 = vector.load %arg1[%c0, %c0_0] : memref<16x32xf32, #tpu.memory_space<vmem>>, vector<16x32xf32>
    %cst = arith.constant dense<0.000000e+00> : vector<16xf32>
    %1 = vector.multi_reduction <add>, %0, %cst [1] : vector<16x32xf32> to vector<16xf32>
    %2 = vector.shape_cast %1 : vector<16xf32> to vector<16x1xf32>
    %cst_1 = arith.constant 3.200000e+01 : f32
    %3 = vector.broadcast %cst_1 : f32 to vector<16x1xf32>
    %4 = arith.divf %2, %3 : vector<16x1xf32>
    %5 = vector.broadcast %4 : vector<16x1xf32> to vector<16x32xf32>
    %6 = arith.subf %0, %5 : vector<16x32xf32>
    %7 = arith.mulf %6, %6 : vector<16x32xf32>
    %cst_2 = arith.constant dense<0.000000e+00> : vector<16xf32>
    %8 = vector.multi_reduction <add>, %7, %cst_2 [1] : vector<16x32xf32> to vector<16xf32>
    %9 = vector.shape_cast %8 : vector<16xf32> to vector<16x1xf32>
    %cst_3 = arith.constant 3.200000e+01 : f32
    %10 = vector.broadcast %cst_3 : f32 to vector<16x1xf32>
    %11 = arith.divf %9, %10 : vector<16x1xf32>
    %cst_4 = arith.constant 9.99999974E-6 : f32
    %12 = vector.broadcast %cst_4 : f32 to vector<16x1xf32>
    %13 = arith.addf %11, %12 : vector<16x1xf32>
    %14 = math.rsqrt %13 : vector<16x1xf32>
    %15 = vector.broadcast %14 : vector<16x1xf32> to vector<16x32xf32>
    %16 = arith.mulf %6, %15 : vector<16x32xf32>
    %c0_5 = arith.constant 0 : index
    %c0_6 = arith.constant 0 : index
    %17 = vector.load %arg2[%c0_5, %c0_6] : memref<1x32xf32, #tpu.memory_space<vmem>>, vector<1x32xf32>
    %18 = vector.broadcast %17 : vector<1x32xf32> to vector<16x32xf32>
    %19 = arith.mulf %16, %18 : vector<16x32xf32>
    %c0_7 = arith.constant 0 : index
    %c0_8 = arith.constant 0 : index
    %20 = vector.load %arg3[%c0_7, %c0_8] : memref<1x32xf32, #tpu.memory_space<vmem>>, vector<1x32xf32>
    %21 = vector.broadcast %20 : vector<1x32xf32> to vector<16x32xf32>
    %22 = arith.addf %19, %21 : vector<16x32xf32>
    %23 = arith.truncf %22 : vector<16x32xf32> to vector<16x32xbf16>
    %c0_9 = arith.constant 0 : index
    %c0_10 = arith.constant 0 : index
    %24 = vector.load %arg4[%c0_9, %c0_10] : memref<16x32xbf16, #tpu.memory_space<vmem>>, vector<16x32xbf16>
    tpu.vector_store %arg4[%c0_9, %c0_10], %23 {strides = array<i32>} : memref<16x32xbf16, #tpu.memory_space<vmem>>, vector<16x32xbf16>,
    return
  }
  func.func @transform_0(%arg0: i32) -> (i32, i32) {
    %c0_i32 = arith.constant 0 : i32
    %c0_i32_0 = arith.constant 0 : i32
    return %arg0, %c0_i32 : i32, i32
  }
  func.func @transform_1(%arg0: i32) -> (i32, i32) {
    %c0_i32 = arith.constant 0 : i32
    %c0_i32_0 = arith.constant 0 : i32
    %c0_i32_1 = arith.constant 0 : i32
    return %c0_i32, %c0_i32_0 : i32, i32
  }
  func.func @transform_2(%arg0: i32) -> (i32, i32) {
    %c0_i32 = arith.constant 0 : i32
    %c0_i32_0 = arith.constant 0 : i32
    %c0_i32_1 = arith.constant 0 : i32
    return %c0_i32, %c0_i32_0 : i32, i32
  }
  func.func @transform_3(%arg0: i32) -> (i32, i32) {
    %c0_i32 = arith.constant 0 : i32
    %c0_i32_0 = arith.constant 0 : i32
    return %arg0, %c0_i32 : i32, i32
  }
}

</mosaic_0001>

<llo_original>
// kernel: tpu_custom_call.1
$region0: #{tpu_custom_call.1}
  #allocation0 [shape = 'u32[]', space=smem, size = 0x4, offset = 0x4, fixed_abs, tag = 'smem constant byte address 0x4 - core index']
  #allocation1 [shape = 'u32[144,128]{1,0:T(1,128)}', space=vmem, size = 0x12000, scoped, tag = 'internal scratch']
  %s0 = inlined_call_operand.hbm [shape: f32[16,32], index: 0, kind: input, shape index: {}]
  %s1 = inlined_call_operand.vmem [shape: f32[1,32], index: 1, kind: input, shape index: {}]
  %s2 = inlined_call_operand.vmem [shape: f32[1,32], index: 2, kind: input, shape index: {}]
  %s3 = inlined_call_operand.hbm [shape: bf16[16,32], index: 3, kind: output, shape index: {}]
  %s4 = sld [smem:[#allocation0]]
  $region26: #{tpu_custom_call.1} parent=0
    _
  %s6 = ssub.s32 1, %s4
  %s7 = scalar_select 0, %s6, %s4
  $region1: #{tpu_custom_call.1} parent=0
    #allocation2 [shape = 'u8[8192]{0}', space=vmem, size = 0x2000, scoped, tag = 'input window, operand 0, single buffered']
    #allocation3 [shape = 's32[1]{0}', space=sflag, size = 0x4, scoped, tag = 'scoped memory for tpu_custom_call.1']
    #allocation4 [shape = 's32[1]{0}', space=sflag, size = 0x4, scoped, tag = 'scoped memory for tpu_custom_call.1']
    #allocation5 [shape = 'u8[4096]{0}', space=vmem, size = 0x1000, scoped, tag = 'output window, operand 0, single buffered']
    %8 = vsyncpa [#allocation3], 0
    %9 = vsyncpa [#allocation4], 0
    // Predicated region
    $region2: #{tpu_custom_call.1} parent=1 // pred_check
      _
    $region3: #{tpu_custom_call.1} parent=1 // pred_check_branch
      %11 = sbr.rel (0) target = $region5
    $region4: #{tpu_custom_call.1} parent=1 // pred_region
      %s13 = ssub.s32 256, 256
      %14 = vsyncadd [#allocation3], %s13
      %s15 = sshll.u32 [#allocation2], 4
      %s16 = int_to_ptr.vmem [resolvable:$true] %s15
      %21 = dma.hbm_to_vmem [thread:$0]  %s0, 256, %s16, [#allocation3], 128, 128, 8
    $region5: #{tpu_custom_call.1} parent=1 // pred_fallthru
      _
    // Predicated region
    $region6: #{tpu_custom_call.1} parent=1 // pred_check
      _
    $region7: #{tpu_custom_call.1} parent=1 // pred_check_branch
      %23 = sbr.rel (0) target = $region9
    $region8: #{tpu_custom_call.1} parent=1 // pred_region
      _
    $region9: #{tpu_custom_call.1} parent=1 // pred_fallthru
      _
    // Predicated region
    $region10: #{tpu_custom_call.1} parent=1 // pred_check
      _
    $region11: #{tpu_custom_call.1} parent=1 // pred_check_branch
      %25 = sbr.rel (0) target = $region13
    $region12: #{tpu_custom_call.1} parent=1 // pred_region
      _
    $region13: #{tpu_custom_call.1} parent=1 // pred_fallthru
      _
    // Predicated region
    $region14: #{tpu_custom_call.1} parent=1 // pred_check
      _
    $region15: #{tpu_custom_call.1} parent=1 // pred_check_branch
      %27 = sbr.rel (0) target = $region17
    $region16: #{tpu_custom_call.1} parent=1 // pred_region
      %28 = dma.done [#allocation3], 256
    $region17: #{tpu_custom_call.1} parent=1 // pred_fallthru
      _
    %v29 = vld [vmem:[#allocation2] sm:$0xff]
    %v30 = vld [vmem:[#allocation2 + $0x8] sm:$0xff]
    %vm31 = vcmask 261120
    %v32 = vsel %vm31, %v29, 0.0
    %33 = vadd.xlane.f32.xlu0 %v32
    %v34 = vpop.xlane.xlu0 %33
    %v35 = vsel %vm31, %v30, 0.0
    %36 = vadd.xlane.f32.xlu0 %v35
    %v37 = vpop.xlane.xlu0 %36
    %v38 = vrcp.pop 32.0
    %v39 = vmul.f32 %v34, %v38
    %v40 = vmul.f32 %v37, %v38
    %v41 = vsub.f32 %v29, %v39
    %v42 = vsub.f32 %v30, %v40
    %v43 = vmul.f32 %v41, %v41
    %v44 = vmul.f32 %v42, %v42
    %v45 = vsel %vm31, %v43, 0.0
    %46 = vadd.xlane.f32.xlu0 %v45
    %v47 = vpop.xlane.xlu0 %46
    %v48 = vsel %vm31, %v44, 0.0
    %49 = vadd.xlane.f32.xlu0 %v48
    %v50 = vpop.xlane.xlu0 %49
    %v51 = vmul.f32 %v47, %v38
    %v52 = vmul.f32 %v50, %v38
    %v53 = vadd.f32 %v51, 1e-05
    %v54 = vadd.f32 %v52, 1e-05
    %v55 = vrsqrt.pop %v53
    %v56 = vrsqrt.pop %v54
    %v57 = vmul.f32 %v41, %v55
    %v58 = vmul.f32 %v42, %v56
    %v59 = vld [vmem:[%s1] sm:$0x1]
    %v61 = vlaneseq
    %v62 = vshrl.u32 %v61, 7
    %v63 = vsub.s32 0, %v62
    %v64 = vrot.slane %v59, %v63
    %v66 = vmul.f32 %v57, %v64
    %v67 = vmul.f32 %v58, %v64
    %v68 = vld [vmem:[%s2] sm:$0x1]
    %v70 = vlaneseq
    %v71 = vshrl.u32 %v70, 7
    %v72 = vsub.s32 0, %v71
    %v73 = vrot.slane %v68, %v72
    %v75 = vadd.f32 %v66, %v73
    %v76 = vadd.f32 %v67, %v73
    %v77 = vpack.c.bf16 %v76, %v75
    %v79 = vunpack.c.l.b16 %v77
    %v80 = vunpack.c.h.b16 %v77
    %v81 = vpack.c.b16 %v79, %v79
    %v82 = vpack.c.b16 %v80, %v80
    %vm85 = vcmask 257024
    %86 = vst.msk [vmem:[#allocation5] sm:$0xf] %vm85, %v81
    %87 = vst.msk [vmem:[#allocation5 + $0x4] sm:$0xf] %vm85, %v82
    // Predicated region
    $region18: #{tpu_custom_call.1} parent=1 // pred_check
      _
    $region19: #{tpu_custom_call.1} parent=1 // pred_check_branch
      %89 = sbr.rel (0) target = $region21
    $region20: #{tpu_custom_call.1} parent=1 // pred_region
      %s91 = ssub.s32 128, 128
      %92 = vsyncadd [#allocation4], %s91
      %s93 = sshll.u32 [#allocation5], 4
      %s94 = int_to_ptr.vmem [resolvable:$true] %s93
      %99 = dma.vmem_to_hbm [thread:$0]  %s94, 128, %s3, [#allocation4], 64, 64, 4
    $region21: #{tpu_custom_call.1} parent=1 // pred_fallthru
      _
    // Predicated region
    $region22: #{tpu_custom_call.1} parent=1 // pred_check
      _
    $region23: #{tpu_custom_call.1} parent=1 // pred_check_branch
      %101 = sbr.rel (0) target = $region25
    $region24: #{tpu_custom_call.1} parent=1 // pred_region
      %102 = dma.done [#allocation4], 128
    $region25: #{tpu_custom_call.1} parent=1 // pred_fallthru
      _
    %103 = vsyncpa [#allocation3], 1
    %104 = vsyncpa [#allocation4], 1

</llo_original>
